<compile_context>
chip_gen: v5e
topology: v5e:2x2
jax: 0.10.0
libtpu: 0.0.40
codegen_flags: <defaults>
</compile_context>

<pallas_src>
import functools
import math

import jax
import jax.numpy as jnp
from jax import lax
from jax.experimental import pallas as pl
from jax.experimental.pallas import tpu as pltpu


def _cdiv(a: int, b: int) -> int:
    return -(-a // b)


def _gemv_kernel(x_ref, w_ref, b_ref, o_ref, *, valid_k, block_k, need_mask):
    # x_ref: (tm, tk) VMEM      w_ref: (1, tk) VMEM (lane-dense weight row)
    # b_ref: (1,) SMEM scalar   o_ref: (tm, 1) f32 VMEM, resident across K.
    c = pl.program_id(0)          # K-split axis (engages v7x's 2nd TensorCore)
    k = pl.program_id(2)          # trailing "arbitrary" K reduction axis
    nk = pl.num_programs(2)

    @pl.when(k == 0)
    def _():
        o_ref[...] = jnp.zeros_like(o_ref)

    x = x_ref[...]
    if need_mask:
        # Zero K-tail columns (and fully out-of-range phantom blocks) so OOB
        # HBM garbage (possibly NaN/Inf) can never leak into real rows.
        col = (c * nk + k) * block_k + lax.broadcasted_iota(
            jnp.int32, x.shape, 1)
        x = jnp.where(col < valid_k, x, 0.0)

    o_ref[...] += lax.dot_general(
        x, w_ref[...],
        dimension_numbers=(((1,), (1,)), ((), ())),
        preferred_element_type=jnp.float32,
    )

    @pl.when(jnp.logical_and(k == nk - 1, c == 0))
    def _():
        o_ref[...] += b_ref[0]    # bias added exactly once across all partials


def mock_forward(images: jax.Array, weight: jax.Array, bias: jax.Array) -> jax.Array:
    """images: (B, ...) f32; weight: torch nn.Linear layout (1, D) (any shape
    with D elements accepted); bias: 1 element.  Returns (B, 1) f32."""
    B = images.shape[0]
    D = math.prod(images.shape[1:])
    x = images.reshape(B, D).astype(jnp.float32)      # nn.Flatten(): view only
    w = weight.reshape(1, D).astype(jnp.float32)      # lane-dense weight row
    b = bias.reshape(1).astype(jnp.float32)           # scalar bias -> SMEM

    # ---- tile sizing --------------------------------------------------------
    tm = B if B <= 512 else 512                 # full-dim block for small batch
    grid_i = _cdiv(B, tm)

    # Keep the double-buffered x + w streams under ~24 MiB of VMEM.  Blocks
    # with < 8 rows still occupy 8 sublanes in VMEM, hence max(tm, 8) (+8 for
    # the sublane-padded weight row block).
    stream_budget = 24 * 1024 * 1024
    rows = max(tm, 8) + 8
    tk_cap = max(256, (stream_budget // (rows * 4 * 2)) // 256 * 256)

    tk = D if D <= tk_cap else tk_cap           # full-dim or multiple of 256
    kblocks = _cdiv(D, tk)

    # One row-block but several K blocks: split K across a leading size-2
    # parallel axis so both v7x TensorCores are engaged (no effect on v5e/v6e).
    ksplit = 2 if (grid_i == 1 and kblocks >= 2) else 1
    grid_k = _cdiv(kblocks, ksplit)

    dw = ksplit * grid_k * tk                   # K extent covered by the grid
    need_mask = dw != D
    if need_mask:
        w = jnp.pad(w, ((0, 0), (0, dw - D)))   # tiny; x itself is never padded

    kmax = kblocks - 1                          # clamp phantom OOB x blocks

    kernel = functools.partial(
        _gemv_kernel, valid_k=D, block_k=tk, need_mask=need_mask)

    partials = pl.pallas_call(
        kernel,
        out_shape=jax.ShapeDtypeStruct((ksplit, B, 1), jnp.float32),
        grid_spec=pltpu.PrefetchScalarGridSpec(
            num_scalar_prefetch=0,
            grid=(ksplit, grid_i, grid_k),
            in_specs=[
                pl.BlockSpec(
                    (tm, tk),
                    lambda c, i, k: (i, jnp.minimum(c * grid_k + k, kmax)),
                ),
                pl.BlockSpec((1, tk), lambda c, i, k: (0, c * grid_k + k)),
                pl.BlockSpec(memory_space=pltpu.MemorySpace.SMEM),
            ],
            out_specs=pl.BlockSpec((None, tm, 1), lambda c, i, k: (c, i, 0)),
        ),
        compiler_params=pltpu.CompilerParams(
            dimension_semantics=("parallel", "parallel", "arbitrary"),
            vmem_limit_bytes=40 * 1024 * 1024,
        ),
        cost_estimate=pl.CostEstimate(
            flops=2 * B * D,
            transcendentals=0,
            bytes_accessed=B * D * 4 + dw * 4 + ksplit * B * 4,
        ),
    )(x, w, b)

    if ksplit == 1:
        return partials[0]
    return jnp.sum(partials, axis=0)


if __name__ == "__main__":
    # Small shapes consistent with an image input: B=2, C=4, H=16, W=16
    B, C, H, W = 2, 4, 16, 16
    input_dim = C * H * W

    key = jax.random.PRNGKey(0)
    k_x, k_w, k_b = jax.random.split(key, 3)

    images = jax.random.normal(k_x, (B, C, H, W), dtype=jnp.float32)

    # Deterministic init mimicking torch.nn.Linear: U(-1/sqrt(D), 1/sqrt(D)),
    # weight stored in torch layout (out_features, in_features) = (1, D).
    bound = 1.0 / math.sqrt(input_dim)
    weight = jax.random.uniform(k_w, (1, input_dim), jnp.float32, -bound, bound)
    bias = jax.random.uniform(k_b, (1,), jnp.float32, -bound, bound)

    out = mock_forward(images, weight, bias)
    out = jax.block_until_ready(out)

    # Cross-check against plain JAX reference: flatten -> x @ W^T + b
    ref = images.reshape(B, -1) @ weight.T + bias.reshape(1, 1)
    assert out.shape == (B, 1), out.shape
    assert jnp.allclose(out, ref, atol=1e-5, rtol=1e-5), (out, ref)

    print("KERNEL_OK")
</pallas_src>

<mosaic_0001>
module attributes {stable_mosaic.version = 11 : i64} {
  func.func @_gemv_kernel(%arg0: i32, %arg1: i32, %arg2: i32, %arg3: memref<2x1024xf32, #tpu.memory_space<vmem>>, %arg4: memref<1x1024xf32, #tpu.memory_space<vmem>>, %arg5: memref<1xf32, #tpu.memory_space<smem>>, %arg6: memref<1x2x1xf32, #tpu.memory_space<vmem>>) attributes {dimension_semantics = [#tpu.dimension_semantics<parallel>, #tpu.dimension_semantics<parallel>, #tpu.dimension_semantics<arbitrary>], iteration_bounds = array<i64: 1, 1, 1>, scalar_prefetch = 0 : i64, scratch_operands = 0 : i64, tpu.core_type = #tpu.core_type<tc>, window_params = [{transform_indices = @transform_0, window_bounds = array<i64: 2, 1024>}, {transform_indices = @transform_1, window_bounds = array<i64: 1, 1024>}, {transform_indices = @transform_2, window_bounds = array<i64: 1>}, {transform_indices = @transform_3, window_bounds = array<i64: 1, 2, 1>}]} {
    %c0_i32 = arith.constant 0 : i32
    %0 = arith.cmpi eq, %arg2, %c0_i32 : i32
    %1 = arith.extui %0 : i1 to i32
    %c0_i32_0 = arith.constant 0 : i32
    %2 = arith.cmpi ne, %1, %c0_i32_0 : i32
    scf.if %2 {
      %cst_13 = arith.constant 0.000000e+00 : f32
      %17 = vector.broadcast %cst_13 : f32 to vector<2x1xf32>
      %c0_14 = arith.constant 0 : index
      %c0_15 = arith.constant 0 : index
      %c0_16 = arith.constant 0 : index
      %18 = vector.load %arg6[%c0_14, %c0_15, %c0_16] : memref<1x2x1xf32, #tpu.memory_space<vmem>>, vector<1x2x1xf32>
      %19 = vector.shape_cast %18 : vector<1x2x1xf32> to vector<2x1xf32>
      %20 = vector.shape_cast %17 : vector<2x1xf32> to vector<1x2x1xf32>
      tpu.vector_store %arg6[%c0_14, %c0_15, %c0_16], %20 {strides = array<i32>} : memref<1x2x1xf32, #tpu.memory_space<vmem>>, vector<1x2x1xf32>,
    } else {
    }
    %c0 = arith.constant 0 : index
    %c0_1 = arith.constant 0 : index
    %3 = vector.load %arg3[%c0, %c0_1] : memref<2x1024xf32, #tpu.memory_space<vmem>>, vector<2x1024xf32>
    %c0_2 = arith.constant 0 : index
    %c0_3 = arith.constant 0 : index
    %c0_4 = arith.constant 0 : index
    %4 = vector.load %arg6[%c0_2, %c0_3, %c0_4] : memref<1x2x1xf32, #tpu.memory_space<vmem>>, vector<1x2x1xf32>
    %5 = vector.shape_cast %4 : vector<1x2x1xf32> to vector<2x1xf32>
    %c0_5 = arith.constant 0 : index
    %c0_6 = arith.constant 0 : index
    %6 = vector.load %arg4[%c0_5, %c0_6] : memref<1x1024xf32, #tpu.memory_space<vmem>>, vector<1x1024xf32>
    %cst = arith.constant dense<0.000000e+00> : vector<2x1xf32>
    %7 = tpu.matmul %3, %6, %cst {dimension_numbers = #tpu.dot_dimension_numbers<[1], [1], [0], [0], [0, 0, 1, 0], [], []>} : vector<2x1024xf32>, vector<1x1024xf32>, vector<2x1xf32> -> vector<2x1xf32>
    %8 = arith.addf %5, %7 : vector<2x1xf32>
    %c0_7 = arith.constant 0 : index
    %c0_8 = arith.constant 0 : index
    %c0_9 = arith.constant 0 : index
    %9 = vector.load %arg6[%c0_7, %c0_8, %c0_9] : memref<1x2x1xf32, #tpu.memory_space<vmem>>, vector<1x2x1xf32>
    %10 = vector.shape_cast %9 : vector<1x2x1xf32> to vector<2x1xf32>
    %11 = vector.shape_cast %8 : vector<2x1xf32> to vector<1x2x1xf32>
    tpu.vector_store %arg6[%c0_7, %c0_8, %c0_9], %11 {strides = array<i32>} : memref<1x2x1xf32, #tpu.memory_space<vmem>>, vector<1x2x1xf32>,
    %c0_i32_10 = arith.constant 0 : i32
    %12 = arith.cmpi eq, %arg2, %c0_i32_10 : i32
    %c0_i32_11 = arith.constant 0 : i32
    %13 = arith.cmpi eq, %arg0, %c0_i32_11 : i32
    %14 = arith.andi %12, %13 : i1
    %15 = arith.extui %14 : i1 to i32
    %c0_i32_12 = arith.constant 0 : i32
    %16 = arith.cmpi ne, %15, %c0_i32_12 : i32
    scf.if %16 {
      %c0_13 = arith.constant 0 : index
      %c0_14 = arith.constant 0 : index
      %c0_15 = arith.constant 0 : index
      %17 = vector.load %arg6[%c0_13, %c0_14, %c0_15] : memref<1x2x1xf32, #tpu.memory_space<vmem>>, vector<1x2x1xf32>
      %18 = vector.shape_cast %17 : vector<1x2x1xf32> to vector<2x1xf32>
      %c0_16 = arith.constant 0 : index
      %19 = memref.load %arg5[%c0_16] : memref<1xf32, #tpu.memory_space<smem>>
      %20 = vector.broadcast %19 : f32 to vector<2x1xf32>
      %21 = arith.addf %18, %20 : vector<2x1xf32>
      %c0_17 = arith.constant 0 : index
      %c0_18 = arith.constant 0 : index
      %c0_19 = arith.constant 0 : index
      %22 = vector.load %arg6[%c0_17, %c0_18, %c0_19] : memref<1x2x1xf32, #tpu.memory_space<vmem>>, vector<1x2x1xf32>
      %23 = vector.shape_cast %22 : vector<1x2x1xf32> to vector<2x1xf32>
      %24 = vector.shape_cast %21 : vector<2x1xf32> to vector<1x2x1xf32>
      tpu.vector_store %arg6[%c0_17, %c0_18, %c0_19], %24 {strides = array<i32>} : memref<1x2x1xf32, #tpu.memory_space<vmem>>, vector<1x2x1xf32>,
    } else {
    }
    return
  }
  func.func @transform_0(%arg0: i32, %arg1: i32, %arg2: i32) -> (i32, i32) {
    %c1_i32 = arith.constant 1 : i32
    %0 = arith.muli %arg0, %c1_i32 : i32
    %1 = arith.addi %0, %arg2 : i32
    %c0_i32 = arith.constant 0 : i32
    %2 = arith.minsi %1, %c0_i32 : i32
    %c0_i32_0 = arith.constant 0 : i32
    return %arg1, %2 : i32, i32
  }
  func.func @transform_1(%arg0: i32, %arg1: i32, %arg2: i32) -> (i32, i32) {
    %c1_i32 = arith.constant 1 : i32
    %0 = arith.muli %arg0, %c1_i32 : i32
    %1 = arith.addi %0, %arg2 : i32
    %c0_i32 = arith.constant 0 : i32
    %c0_i32_0 = arith.constant 0 : i32
    return %c0_i32, %1 : i32, i32
  }
  func.func @transform_2(%arg0: i32, %arg1: i32, %arg2: i32) -> i32 {
    %c0_i32 = arith.constant 0 : i32
    %c0_i32_0 = arith.constant 0 : i32
    return %c0_i32 : i32
  }
  func.func @transform_3(%arg0: i32, %arg1: i32, %arg2: i32) -> (i32, i32, i32) {
    %c0_i32 = arith.constant 0 : i32
    %c0_i32_0 = arith.constant 0 : i32
    return %arg0, %arg1, %c0_i32 : i32, i32, i32
  }
}

</mosaic_0001>

<llo_original>
// kernel: tpu_custom_call.1
$region0: #{tpu_custom_call.1}
  #allocation0 [shape = 'u32[]', space=smem, size = 0x4, offset = 0x4, fixed_abs, tag = 'smem constant byte address 0x4 - core index']
  #allocation1 [shape = 'u32[72,128]{1,0:T(1,128)}', space=vmem, size = 0x9000, scoped, tag = 'internal scratch']
  #allocation2 [shape = 'f32[1]{0:T(128)S(6)}', space=smem, size = 0x200, scoped, tag = 'scoped memory for tpu_custom_call.1']
  %s0 = inlined_call_operand.hbm [shape: f32[2,1024], index: 0, kind: input, shape index: {}]
  %s1 = inlined_call_operand.hbm [shape: f32[1,1024], index: 1, kind: input, shape index: {}]
  %s2 = inlined_call_operand.<no memory space> [shape: f32[1], index: 2, kind: input, shape index: {}]
  %s3 = inlined_call_operand.vmem [shape: f32[1,2,1], index: 3, kind: output, shape index: {}]
  %s4 = sld [smem:[#allocation0]]
  $region38: #{tpu_custom_call.1} parent=0
    _
  %s6 = ssub.s32 1, %s4
  %s7 = scalar_select 0, %s6, %s4
  %8 = sst [smem:[#allocation2]] %s2
  $region1: #{tpu_custom_call.1} parent=0
    #allocation3 [shape = 'u8[8192]{0}', space=vmem, size = 0x2000, scoped, tag = 'input window, operand 0, single buffered']
    #allocation4 [shape = 's32[1]{0}', space=sflag, size = 0x4, scoped, tag = 'scoped memory for tpu_custom_call.1']
    #allocation5 [shape = 'u8[4096]{0}', space=vmem, size = 0x1000, scoped, tag = 'input window, operand 1, single buffered']
    #allocation6 [shape = 's32[1]{0}', space=sflag, size = 0x4, scoped, tag = 'scoped memory for tpu_custom_call.1']
    %9 = vsyncpa [#allocation4], 0
    %10 = vsyncpa [#allocation6], 0
    // Predicated region
    $region2: #{tpu_custom_call.1} parent=1 // pred_check
      _
    $region3: #{tpu_custom_call.1} parent=1 // pred_check_branch
      %12 = sbr.rel (0) target = $region5
    $region4: #{tpu_custom_call.1} parent=1 // pred_region
      %s13 = sadd.s32 0, 0
      %p14 = scmp.lt.s32.totalorder %s13, 0
      %s15 = scalar_select %p14, %s13, 0
      %s16 = smul.u32 8, %s15
      %18 = vsyncadd [#allocation4], 0
      %s19 = smul.addr %s16, 2
      %s20 = scalar_lea.hbm %s0, %s19
      %s22 = sshll.u32 %s20, 4
      %s23 = int_to_ptr.hbm [resolvable:$true] %s22
      %s24 = sshll.u32 [#allocation3], 4
      %s25 = int_to_ptr.vmem [resolvable:$true] %s24
      %27 = dma.hbm_to_vmem [thread:$0]  %s23, 256, %s25, [#allocation4]
    $region5: #{tpu_custom_call.1} parent=1 // pred_fallthru
      _
    // Predicated region
    $region6: #{tpu_custom_call.1} parent=1 // pred_check
      _
    $region7: #{tpu_custom_call.1} parent=1 // pred_check_branch
      %29 = sbr.rel (0) target = $region9
    $region8: #{tpu_custom_call.1} parent=1 // pred_region
      %s30 = sadd.s32 0, 0
      %s31 = smul.u32 8, %s30
      %33 = vsyncadd [#allocation6], 0
      %s34 = scalar_lea.hbm %s1, %s31
      %s36 = sshll.u32 %s34, 4
      %s37 = int_to_ptr.hbm [resolvable:$true] %s36
      %s38 = sshll.u32 [#allocation5], 4
      %s39 = int_to_ptr.vmem [resolvable:$true] %s38
      %41 = dma.hbm_to_vmem [thread:$0]  %s37, 128, %s39, [#allocation6]
    $region9: #{tpu_custom_call.1} parent=1 // pred_fallthru
      _
    // Predicated region
    $region10: #{tpu_custom_call.1} parent=1 // pred_check
      _
    $region11: #{tpu_custom_call.1} parent=1 // pred_check_branch
      %43 = sbr.rel (0) target = $region13
    $region12: #{tpu_custom_call.1} parent=1 // pred_region
      _
    $region13: #{tpu_custom_call.1} parent=1 // pred_fallthru
      _
    // Predicated region
    $region14: #{tpu_custom_call.1} parent=1 // pred_check
      _
    $region15: #{tpu_custom_call.1} parent=1 // pred_check_branch
      %45 = sbr.rel (0) target = $region17
    $region16: #{tpu_custom_call.1} parent=1 // pred_region
      %47 = dma.done [#allocation4], 256
    $region17: #{tpu_custom_call.1} parent=1 // pred_fallthru
      _
    // Predicated region
    $region18: #{tpu_custom_call.1} parent=1 // pred_check
      _
    $region19: #{tpu_custom_call.1} parent=1 // pred_check_branch
      %49 = sbr.rel (0) target = $region21
    $region20: #{tpu_custom_call.1} parent=1 // pred_region
      %51 = dma.done [#allocation6], 128
    $region21: #{tpu_custom_call.1} parent=1 // pred_fallthru
      _
    %s52 = sadd.s32 0, 0
    %p53 = scmp.lt.s32.totalorder %s52, 0
    %s54 = scalar_select %p53, %s52, 0
    %s55 = smul.u32 8, %s54
    %s56 = sadd.s32 0, 0
    %s57 = smul.u32 8, %s56
    %p58 = scmp.eq.s32.totalorder 0, 0
    // Predicated region
    $region22: #{tpu_custom_call.1} parent=1 // pred_check
      %p59 = pneg %p58
    $region23: #{tpu_custom_call.1} parent=1 // pred_check_branch
      %61 = sbr.rel (%p59) target = $region25
    $region24: #{tpu_custom_call.1} parent=1 // pred_region
      %vm62 = vcmask 1024
      %63 = vst.msk [vmem:[%s3] sm:$0x3] %vm62, 0.0
    $region25: #{tpu_custom_call.1} parent=1 // pred_fallthru
      _
    %v64 = vld [vmem:[#allocation3] sm:$0xff]
    %v65 = vld [vmem:[#allocation3 + $0x8] sm:$0xff]
    %v66 = vld [vmem:[%s3] sm:$0x3]
    %v67 = vld [vmem:[#allocation5] sm:$0xff]
    %v69 = vperm.slane %v67, 0
    %v70 = vperm.slane %v67, 1
    %v71 = vperm.slane %v67, 2
    %v72 = vperm.slane %v67, 3
    %v73 = vperm.slane %v67, 4
    %v74 = vperm.slane %v67, 5
    %v75 = vperm.slane %v67, 6
    %v76 = vperm.slane %v67, 7
    %v77 = vrot.slane %v70, 6
    %v78 = vrot.slane %v71, 4
    %v79 = vrot.slane %v72, 2
    %v80 = vrot.slane %v74, 6
    %v81 = vrot.slane %v75, 4
    %v82 = vrot.slane %v76, 2
    %vm83 = vcmask 1041408
    %v84 = vsel %vm83, %v69, %v77
    %vm85 = vcmask 1045508
    %v86 = vsel %vm85, %v78, %v79
    %vm87 = vcmask 1043456
    %v88 = vsel %vm87, %v84, %v86
    %v89 = vsel %vm83, %v73, %v80
    %v90 = vsel %vm85, %v81, %v82
    %v91 = vsel %vm87, %v89, %v90
    %v94 = vmul.f32 %v64, %v88
    %v95 = vmul.f32 %v65, %v91
    %98 = vst [vmem:[#allocation1] ss:$4 sm:$0xff] %v94
    %s99 = scalar_lea.vmem [#allocation1], 32
    %100 = vst [vmem:[%s99] ss:$4 sm:$0xff] %v95
    %v101 = vld.sshfl [vmem:[#allocation1] sm:$0xff pattern:$0x73625140]
    %v102 = vld.sshfl [vmem:[#allocation1 + $0x8] sm:$0xff pattern:$0x73625140]
    %v103 = vld.sshfl [vmem:[#allocation1 + $0x10] sm:$0xff pattern:$0x73625140]
    %v104 = vld.sshfl [vmem:[#allocation1 + $0x18] sm:$0xff pattern:$0x73625140]
    %v105 = vld.sshfl [vmem:[#allocation1 + $0x20] sm:$0xff pattern:$0x73625140]
    %v106 = vld.sshfl [vmem:[#allocation1 + $0x28] sm:$0xff pattern:$0x73625140]
    %v107 = vld.sshfl [vmem:[#allocation1 + $0x30] sm:$0xff pattern:$0x73625140]
    %v108 = vld.sshfl [vmem:[#allocation1 + $0x38] sm:$0xff pattern:$0x73625140]
    %v117 = vsel %vm83, %v101, 0.0
    %v118 = vsel %vm83, %v102, 0.0
    %v119 = vadd.f32 %v117, %v118
    %v120 = vsel %vm83, %v103, 0.0
    %v121 = vadd.f32 %v119, %v120
    %v122 = vsel %vm83, %v104, 0.0
    %v123 = vadd.f32 %v121, %v122
    %v124 = vsel %vm83, %v105, 0.0
    %v125 = vadd.f32 %v123, %v124
    %v126 = vsel %vm83, %v106, 0.0
    %v127 = vadd.f32 %v125, %v126
    %v128 = vsel %vm83, %v107, 0.0
    %v129 = vadd.f32 %v127, %v128
    %v130 = vsel %vm83, %v108, 0.0
    %v131 = vadd.f32 %v129, %v130
    %132 = vadd.xlane.f32.xlu0 %v131
    %v133 = vpop.xlane.xlu0 %132
    %v134 = vadd.f32 %v66, %v133
    %vm135 = vcmask 1024
    %136 = vst.msk [vmem:[%s3] sm:$0x3] %vm135, %v134
    %p137 = scmp.eq.s32.totalorder 0, 0
    %p138 = pnand %p58, %p137
    %p139 = pneg %p138
    // Predicated region
    $region26: #{tpu_custom_call.1} parent=1 // pred_check
      _
    $region27: #{tpu_custom_call.1} parent=1 // pred_check_branch
      %141 = sbr.rel (%p138) target = $region29
    $region28: #{tpu_custom_call.1} parent=1 // pred_region
      %v142 = vld [vmem:[%s3] sm:$0x3]
      %s143 = sld [smem:[#allocation2]]
      %v144 = vstv %s143
      %v145 = vadd.f32 %v142, %v144
      %146 = vst.msk [vmem:[%s3] sm:$0x3] %vm135, %v145
    $region29: #{tpu_custom_call.1} parent=1 // pred_fallthru
      _
    // Predicated region
    $region30: #{tpu_custom_call.1} parent=1 // pred_check
      _
    $region31: #{tpu_custom_call.1} parent=1 // pred_check_branch
      %148 = sbr.rel (0) target = $region33
    $region32: #{tpu_custom_call.1} parent=1 // pred_region
      _
    $region33: #{tpu_custom_call.1} parent=1 // pred_fallthru
      _
    // Predicated region
    $region34: #{tpu_custom_call.1} parent=1 // pred_check
      _
    $region35: #{tpu_custom_call.1} parent=1 // pred_check_branch
      %150 = sbr.rel (0) target = $region37
    $region36: #{tpu_custom_call.1} parent=1 // pred_region
      _
    $region37: #{tpu_custom_call.1} parent=1 // pred_fallthru
      _
    %151 = vsyncpa [#allocation4], 1
    %152 = vsyncpa [#allocation6], 1

</llo_original>
